<compile_context>
chip_gen: v5e
topology: v5e:2x2
jax: 0.10.0
libtpu: 0.0.40
codegen_flags: <defaults>
</compile_context>

<pallas_src>
import functools
from typing import NamedTuple

import jax
import jax.numpy as jnp
from jax.experimental import pallas as pl
from jax.experimental.pallas import tpu as pltpu


def _round_up(x, m):
    return ((x + m - 1) // m) * m


def _embedding_gather_kernel(idx_ref, table_ref, out_ref, acc_ref, *,
                             v_chunk, num_chunks):
    """Gather one token block of embedding rows via one-hot MXU matmuls.

    idx_ref:   [TM, 1]       int32 ids into the combined (padded) table.
    table_ref: [Vc*nc, E]    combined bf16 table, VMEM-resident.
    out_ref:   [TM, E]       gathered embeddings (bf16).
    acc_ref:   [TM, E]       f32 scratch accumulator (used when nc > 1).
    """
    idx = idx_ref[...]                                             # [TM, 1]
    tm = out_ref.shape[0]
    col = jax.lax.broadcasted_iota(jnp.int32, (tm, v_chunk), 1)    # [TM, Vc]

    if num_chunks == 1:
        # Single-chunk fast path: one bf16 matmul straight into the out tile.
        onehot = (col == idx).astype(table_ref.dtype)
        out_ref[...] = jnp.dot(
            onehot, table_ref[...], preferred_element_type=jnp.float32
        ).astype(out_ref.dtype)
    else:
        acc_ref[...] = jnp.zeros_like(acc_ref)

        def chunk_body(c, carry):
            start = pl.multiple_of(c * v_chunk, v_chunk)
            chunk = table_ref[pl.ds(start, v_chunk), :]            # [Vc, E] bf16
            onehot = (col == (idx - start)).astype(chunk.dtype)    # [TM, Vc] bf16
            acc_ref[...] += jnp.dot(onehot, chunk,
                                    preferred_element_type=jnp.float32)
            return carry

        jax.lax.fori_loop(0, num_chunks, chunk_body, 0,
                          unroll=num_chunks <= 8)
        out_ref[...] = acc_ref[...].astype(out_ref.dtype)


class PreparedEmbedding(NamedTuple):
    table: jax.Array       # [V_pad, E] combined table (bf16), padding rows zeroed
    offsets: dict          # order -> row offset into the combined table
    v_chunk: int           # in-kernel vocab chunk (multiple of 8)
    num_chunks: int        # V_pad // v_chunk


def prepare_input_event_embedding(tables, orders, *, compute_dtype=jnp.bfloat16,
                                  v_chunk_max=2048):
    """Build the combined embedding table ONCE (hoisted out of the forward path)."""
    emb_size = tables[orders[0]].shape[1]
    offsets, parts = {}, []
    offset = 0
    for k in orders:
        t = tables[k]
        assert t.shape[1] == emb_size
        offsets[k] = offset
        parts.append(t.astype(compute_dtype))
        offset += t.shape[0]
    v_total = offset
    v_chunk = min(v_chunk_max, _round_up(v_total, 8))
    v_pad = _round_up(v_total, v_chunk)
    table = jnp.concatenate(parts, axis=0)
    table = jnp.pad(table, ((0, v_pad - v_total), (0, 0)))   # pad rows are zero
    return PreparedEmbedding(table, offsets, v_chunk, v_pad // v_chunk)


def _vmem_limit_bytes(table_bytes, token_block, emb_size, v_chunk, out_itemsize):
    need = (
        2 * table_bytes                                # resident table (2 bufs)
        + 2 * token_block * 4                          # idx tiles
        + 2 * token_block * emb_size * out_itemsize    # output tiles
        + token_block * emb_size * 4                   # f32 accumulator scratch
        + token_block * v_chunk * 8                    # onehot + iota working set
    )
    need = int(need * 1.25) + (2 << 20)                # compiler headroom
    try:
        cap = int(getattr(pltpu.get_tpu_info(), "vmem_capacity_bytes",
                          64 * 1024 * 1024) * 3 // 4)
    except Exception:
        cap = 48 * 1024 * 1024                         # safe on v7x (64 MiB / TC)
    return max(16 * 1024 * 1024, min(need, cap))


def input_event_embedding_forward(inputs_v, prepared, *, token_block=512):
    """Pallas equivalent of InputEventEmbedding.forward.

    inputs_v: dict order -> int32 [B, L_k] index arrays (same iteration order as
              the PyTorch dict); ids are assumed in-range like nn.Embedding
              (out-of-range ids silently gather a zero row instead of raising).
    prepared: PreparedEmbedding from prepare_input_event_embedding.
    Returns:  bf16 [B, sum_k L_k, emb_size].
    """
    orders = list(inputs_v.keys())
    assert len(orders) > 0
    table = prepared.table
    v_pad, emb_size = table.shape
    batch = inputs_v[orders[0]].shape[0]
    assert token_block % 8 == 0

    # torch.cat(emb_list, 1) == one gather after offsetting ids into the
    # combined table and concatenating ids along the event axis (cheap, int32).
    ids = jnp.concatenate(
        [inputs_v[k].astype(jnp.int32) + prepared.offsets[k] for k in orders],
        axis=1)                                            # [B, T_total]

    total_events = ids.shape[1]
    total_tokens = batch * total_events
    num_blocks = pl.cdiv(total_tokens, token_block)
    padded_tokens = num_blocks * token_block
    flat_ids = jnp.pad(ids.reshape(-1), (0, padded_tokens - total_tokens))
    idx_3d = flat_ids.reshape(num_blocks, token_block, 1)  # [G, TM, 1]

    kernel = functools.partial(_embedding_gather_kernel,
                               v_chunk=prepared.v_chunk,
                               num_chunks=prepared.num_chunks)
    out_dtype = table.dtype
    vmem_limit = _vmem_limit_bytes(
        v_pad * emb_size * table.dtype.itemsize, token_block, emb_size,
        prepared.v_chunk, jnp.dtype(out_dtype).itemsize)

    out_flat = pl.pallas_call(
        kernel,
        out_shape=jax.ShapeDtypeStruct((padded_tokens, emb_size), out_dtype),
        grid_spec=pltpu.PrefetchScalarGridSpec(
            num_scalar_prefetch=0,
            grid=(num_blocks,),
            in_specs=[
                # ids: one (TM, 1) block per grid step.
                pl.BlockSpec((None, token_block, 1), lambda g: (g, 0, 0)),
                # table: full, constant index_map -> loaded once, VMEM-resident.
                pl.BlockSpec((v_pad, emb_size), lambda g: (0, 0)),
            ],
            out_specs=pl.BlockSpec((token_block, emb_size), lambda g: (g, 0)),
            scratch_shapes=[pltpu.VMEM((token_block, emb_size), jnp.float32)],
        ),
        compiler_params=pltpu.CompilerParams(
            dimension_semantics=("parallel",),
            vmem_limit_bytes=vmem_limit,
        ),
    )(idx_3d, table)

    return out_flat[:total_tokens].reshape(batch, total_events, emb_size)


def init_embedding_tables(key, orders, vocab_size, emb_size, padding_idx):
    """nn.Embedding-style init; the padding_idx row is zeroed (forward semantics)."""
    tables = {}
    keys = jax.random.split(key, len(orders))
    for k, kk, vs in zip(orders, keys, vocab_size):
        tab = jax.random.normal(kk, (vs, emb_size), dtype=jnp.float32)
        tab = tab.at[padding_idx].set(0.0)
        tables[k] = tab
    return tables


if __name__ == "__main__":
    # Small shapes consistent with the module: 3 event "orders", per-order
    # vocabularies, shared emb_size (128 -> lane-dense output tiles), batch=2.
    orders = ["medication", "diagnosis", "procedure"]
    vocab_size = [40, 30, 20]
    emb_size = 128
    padding_idx = 0
    batch = 2
    seq_lens = {"medication": 10, "diagnosis": 8, "procedure": 6}

    key = jax.random.PRNGKey(0)
    k_tab, k_idx = jax.random.split(key)
    tables = init_embedding_tables(k_tab, orders, vocab_size, emb_size, padding_idx)

    # Hoisted one-time preparation (combined bf16 table + per-order offsets).
    prepared = prepare_input_event_embedding(tables, orders)

    # Build inputs['v']: per-order index tensors, with the last event of every
    # sequence set to padding_idx to exercise the zero padding row.
    inputs_v = {}
    idx_keys = jax.random.split(k_idx, len(orders))
    for k, kk, vs in zip(orders, idx_keys, vocab_size):
        idx = jax.random.randint(kk, (batch, seq_lens[k]), 0, vs, dtype=jnp.int32)
        idx = idx.at[:, -1].set(padding_idx)
        inputs_v[k] = idx

    out = input_event_embedding_forward(inputs_v, prepared)
    out = jax.block_until_ready(out)

    # Pure-JAX reference: per-order lookup (take) then concat along dim 1,
    # using the same bf16 compute dtype as the kernel's combined table.
    ref = jnp.concatenate(
        [jnp.take(tables[k].astype(jnp.bfloat16), inputs_v[k], axis=0)
         for k in orders],
        axis=1)

    total_events = sum(seq_lens[k] for k in orders)
    assert out.shape == (batch, total_events, emb_size), out.shape
    assert out.dtype == jnp.bfloat16
    assert jnp.allclose(out.astype(jnp.float32), ref.astype(jnp.float32),
                        atol=1e-6, rtol=0.0)
    # padding_idx rows must be exactly zero, like nn.Embedding (one per order).
    assert jnp.all(out[:, seq_lens["medication"] - 1, :] == 0.0)
    assert jnp.all(out[:, seq_lens["medication"] + seq_lens["diagnosis"] - 1, :] == 0.0)
    assert jnp.all(out[:, total_events - 1, :] == 0.0)

    print("KERNEL_OK")
</pallas_src>

<mosaic_0001>
module attributes {stable_mosaic.version = 11 : i64} {
  func.func @_embedding_gather_kernel(%arg0: i32, %arg1: memref<1x512x1xi32, #tpu.memory_space<vmem>>, %arg2: memref<96x128xbf16, #tpu.memory_space<vmem>>, %arg3: memref<512x128xbf16, #tpu.memory_space<vmem>>, %arg4: memref<512x128xf32, #tpu.memory_space<vmem>>) attributes {dimension_semantics = [#tpu.dimension_semantics<parallel>], iteration_bounds = array<i64: 1>, scalar_prefetch = 0 : i64, scratch_operands = 1 : i64, tpu.core_type = #tpu.core_type<tc>, window_params = [{transform_indices = @transform_0, window_bounds = array<i64: 1, 512, 1>}, {pipeline_mode = #tpu.pipeline_mode<synchronous>, transform_indices = @transform_1, window_bounds = array<i64: 96, 128>}, {transform_indices = @transform_2, window_bounds = array<i64: 512, 128>}]} {
    %c0 = arith.constant 0 : index
    %c0_0 = arith.constant 0 : index
    %c0_1 = arith.constant 0 : index
    %0 = vector.load %arg1[%c0, %c0_0, %c0_1] : memref<1x512x1xi32, #tpu.memory_space<vmem>>, vector<1x512x1xi32>
    %1 = vector.shape_cast %0 : vector<1x512x1xi32> to vector<512x1xi32>
    %2 = tpu.iota {dimensions = array<i32: 1>} : vector<512x96xi32>
    %3 = vector.broadcast %1 : vector<512x1xi32> to vector<512x96xi32>
    %4 = arith.cmpi eq, %2, %3 : vector<512x96xi32>
    %5 = arith.extui %4 : vector<512x96xi1> to vector<512x96xi32>
    %6 = arith.sitofp %5 : vector<512x96xi32> to vector<512x96xf32>
    %7 = arith.truncf %6 : vector<512x96xf32> to vector<512x96xbf16>
    %c0_2 = arith.constant 0 : index
    %c0_3 = arith.constant 0 : index
    %8 = vector.load %arg2[%c0_2, %c0_3] : memref<96x128xbf16, #tpu.memory_space<vmem>>, vector<96x128xbf16>
    %cst = arith.constant dense<0.000000e+00> : vector<512x128xf32>
    %9 = tpu.matmul %7, %8, %cst {dimension_numbers = #tpu.dot_dimension_numbers<[1], [0], [0], [1], [0, 0, 1, 1], [], []>} : vector<512x96xbf16>, vector<96x128xbf16>, vector<512x128xf32> -> vector<512x128xf32>
    %10 = arith.truncf %9 : vector<512x128xf32> to vector<512x128xbf16>
    %c0_4 = arith.constant 0 : index
    %c0_5 = arith.constant 0 : index
    %11 = vector.load %arg3[%c0_4, %c0_5] : memref<512x128xbf16, #tpu.memory_space<vmem>>, vector<512x128xbf16>
    tpu.vector_store %arg3[%c0_4, %c0_5], %10 {strides = array<i32>} : memref<512x128xbf16, #tpu.memory_space<vmem>>, vector<512x128xbf16>,
    return
  }
  func.func @transform_0(%arg0: i32) -> (i32, i32, i32) {
    %c0_i32 = arith.constant 0 : i32
    %c0_i32_0 = arith.constant 0 : i32
    %c0_i32_1 = arith.constant 0 : i32
    return %arg0, %c0_i32, %c0_i32_0 : i32, i32, i32
  }
  func.func @transform_1(%arg0: i32) -> (i32, i32) {
    %c0_i32 = arith.constant 0 : i32
    %c0_i32_0 = arith.constant 0 : i32
    %c0_i32_1 = arith.constant 0 : i32
    return %c0_i32, %c0_i32_0 : i32, i32
  }
  func.func @transform_2(%arg0: i32) -> (i32, i32) {
    %c0_i32 = arith.constant 0 : i32
    %c0_i32_0 = arith.constant 0 : i32
    return %arg0, %c0_i32 : i32, i32
  }
}

</mosaic_0001>

<llo_original>
// kernel: tpu_custom_call.1
$region0: #{tpu_custom_call.1}
  #allocation0 [shape = 'u32[]', space=smem, size = 0x4, offset = 0x4, fixed_abs, tag = 'smem constant byte address 0x4 - core index']
  #allocation1 [shape = 'u32[72,128]{1,0:T(1,128)}', space=vmem, size = 0x9000, scoped, tag = 'internal scratch']
  #allocation2 [shape = 'f32[512,128]{1,0:T(8,128)}', space=vmem, size = 0x40000, scoped, tag = 'scratch operand']
  %s0 = inlined_call_operand.vmem [shape: s32[1,512,1], index: 0, kind: input, shape index: {}]
  %s1 = inlined_call_operand.vmem [shape: bf16[96,128], index: 1, kind: input, shape index: {}]
  %s2 = inlined_call_operand.hbm [shape: bf16[512,128], index: 2, kind: output, shape index: {}]
  %s3 = sld [smem:[#allocation0]]
  $region18: #{tpu_custom_call.1} parent=0
    _
  %s5 = ssub.s32 1, %s3
  %s6 = scalar_select 0, %s5, %s3
  $region1: #{tpu_custom_call.1} parent=0
    #allocation3 [shape = 'u8[131072]{0}', space=vmem, size = 0x20000, scoped, tag = 'output window, operand 0, single buffered']
    #allocation4 [shape = 's32[1]{0}', space=sflag, size = 0x4, scoped, tag = 'scoped memory for tpu_custom_call.1']
    %7 = vsyncpa [#allocation4], 0
    // Predicated region
    $region2: #{tpu_custom_call.1} parent=1 // pred_check
      _
    $region3: #{tpu_custom_call.1} parent=1 // pred_check_branch
      %9 = sbr.rel (0) target = $region5
    $region4: #{tpu_custom_call.1} parent=1 // pred_region
      _
    $region5: #{tpu_custom_call.1} parent=1 // pred_fallthru
      _
    // Predicated region
    $region6: #{tpu_custom_call.1} parent=1 // pred_check
      _
    $region7: #{tpu_custom_call.1} parent=1 // pred_check_branch
      %11 = sbr.rel (0) target = $region9
    $region8: #{tpu_custom_call.1} parent=1 // pred_region
      _
    $region9: #{tpu_custom_call.1} parent=1 // pred_fallthru
      _
    %v13 = vld [vmem:[%s0] sm:$0xff]
    %v14 = vld [vmem:[%s0 + $0x8] sm:$0xff]
    %v15 = vld [vmem:[%s0 + $0x10] sm:$0xff]
    %v16 = vld [vmem:[%s0 + $0x18] sm:$0xff]
    %v17 = vld [vmem:[%s0 + $0x20] sm:$0xff]
    %v18 = vld [vmem:[%s0 + $0x28] sm:$0xff]
    %v19 = vld [vmem:[%s0 + $0x30] sm:$0xff]
    %v20 = vld [vmem:[%s0 + $0x38] sm:$0xff]
    %v21 = vld [vmem:[%s0 + $0x40] sm:$0xff]
    %v22 = vld [vmem:[%s0 + $0x48] sm:$0xff]
    %v23 = vld [vmem:[%s0 + $0x50] sm:$0xff]
    %v24 = vld [vmem:[%s0 + $0x58] sm:$0xff]
    %v25 = vld [vmem:[%s0 + $0x60] sm:$0xff]
    %v26 = vld [vmem:[%s0 + $0x68] sm:$0xff]
    %v27 = vld [vmem:[%s0 + $0x70] sm:$0xff]
    %v28 = vld [vmem:[%s0 + $0x78] sm:$0xff]
    %v29 = vld [vmem:[%s0 + $0x80] sm:$0xff]
    %v30 = vld [vmem:[%s0 + $0x88] sm:$0xff]
    %v31 = vld [vmem:[%s0 + $0x90] sm:$0xff]
    %v32 = vld [vmem:[%s0 + $0x98] sm:$0xff]
    %v33 = vld [vmem:[%s0 + $0xa0] sm:$0xff]
    %v34 = vld [vmem:[%s0 + $0xa8] sm:$0xff]
    %v35 = vld [vmem:[%s0 + $0xb0] sm:$0xff]
    %v36 = vld [vmem:[%s0 + $0xb8] sm:$0xff]
    %v37 = vld [vmem:[%s0 + $0xc0] sm:$0xff]
    %v38 = vld [vmem:[%s0 + $0xc8] sm:$0xff]
    %v39 = vld [vmem:[%s0 + $0xd0] sm:$0xff]
    %v40 = vld [vmem:[%s0 + $0xd8] sm:$0xff]
    %v41 = vld [vmem:[%s0 + $0xe0] sm:$0xff]
    %v42 = vld [vmem:[%s0 + $0xe8] sm:$0xff]
    %v43 = vld [vmem:[%s0 + $0xf0] sm:$0xff]
    %v44 = vld [vmem:[%s0 + $0xf8] sm:$0xff]
    %v45 = vld [vmem:[%s0 + $0x100] sm:$0xff]
    %v46 = vld [vmem:[%s0 + $0x108] sm:$0xff]
    %v47 = vld [vmem:[%s0 + $0x110] sm:$0xff]
    %v48 = vld [vmem:[%s0 + $0x118] sm:$0xff]
    %v49 = vld [vmem:[%s0 + $0x120] sm:$0xff]
    %v50 = vld [vmem:[%s0 + $0x128] sm:$0xff]
    %v51 = vld [vmem:[%s0 + $0x130] sm:$0xff]
    %v52 = vld [vmem:[%s0 + $0x138] sm:$0xff]
    %v53 = vld [vmem:[%s0 + $0x140] sm:$0xff]
    %v54 = vld [vmem:[%s0 + $0x148] sm:$0xff]
    %v55 = vld [vmem:[%s0 + $0x150] sm:$0xff]
    %v56 = vld [vmem:[%s0 + $0x158] sm:$0xff]
    %v57 = vld [vmem:[%s0 + $0x160] sm:$0xff]
    %v58 = vld [vmem:[%s0 + $0x168] sm:$0xff]
    %v59 = vld [vmem:[%s0 + $0x170] sm:$0xff]
    %v60 = vld [vmem:[%s0 + $0x178] sm:$0xff]
    %v61 = vld [vmem:[%s0 + $0x180] sm:$0xff]
    %v62 = vld [vmem:[%s0 + $0x188] sm:$0xff]
    %v63 = vld [vmem:[%s0 + $0x190] sm:$0xff]
    %v64 = vld [vmem:[%s0 + $0x198] sm:$0xff]
    %v65 = vld [vmem:[%s0 + $0x1a0] sm:$0xff]
    %v66 = vld [vmem:[%s0 + $0x1a8] sm:$0xff]
    %v67 = vld [vmem:[%s0 + $0x1b0] sm:$0xff]
    %v68 = vld [vmem:[%s0 + $0x1b8] sm:$0xff]
    %v69 = vld [vmem:[%s0 + $0x1c0] sm:$0xff]
    %v70 = vld [vmem:[%s0 + $0x1c8] sm:$0xff]
    %v71 = vld [vmem:[%s0 + $0x1d0] sm:$0xff]
    %v72 = vld [vmem:[%s0 + $0x1d8] sm:$0xff]
    %v73 = vld [vmem:[%s0 + $0x1e0] sm:$0xff]
    %v74 = vld [vmem:[%s0 + $0x1e8] sm:$0xff]
    %v75 = vld [vmem:[%s0 + $0x1f0] sm:$0xff]
    %v76 = vld [vmem:[%s0 + $0x1f8] sm:$0xff]
    %v77 = vlaneseq
    %v78 = vand.u32 %v77, 127
    %79 = vset.pattern.permute.xlu0 0
    %80 = vperm.xlu0 %79, %v13
    %v81 = vpop.permute.xlu0 %80
    %82 = vset.pattern.permute.xlu0 0
    %83 = vperm.xlu0 %82, %v14
    %v84 = vpop.permute.xlu0 %83
    %85 = vset.pattern.permute.xlu0 0
    %86 = vperm.xlu0 %85, %v15
    %v87 = vpop.permute.xlu0 %86
    %88 = vset.pattern.permute.xlu0 0
    %89 = vperm.xlu0 %88, %v16
    %v90 = vpop.permute.xlu0 %89
    %91 = vset.pattern.permute.xlu0 0
    %92 = vperm.xlu0 %91, %v17
    %v93 = vpop.permute.xlu0 %92
    %94 = vset.pattern.permute.xlu0 0
    %95 = vperm.xlu0 %94, %v18
    %v96 = vpop.permute.xlu0 %95
    %97 = vset.pattern.permute.xlu0 0
    %98 = vperm.xlu0 %97, %v19
    %v99 = vpop.permute.xlu0 %98
    %100 = vset.pattern.permute.xlu0 0
    %101 = vperm.xlu0 %100, %v20
    %v102 = vpop.permute.xlu0 %101
    %103 = vset.pattern.permute.xlu0 0
    %104 = vperm.xlu0 %103, %v21
    %v105 = vpop.permute.xlu0 %104
    %106 = vset.pattern.permute.xlu0 0
    %107 = vperm.xlu0 %106, %v22
    %v108 = vpop.permute.xlu0 %107
    %109 = vset.pattern.permute.xlu0 0
    %110 = vperm.xlu0 %109, %v23
    %v111 = vpop.permute.xlu0 %110
    %112 = vset.pattern.permute.xlu0 0
    %113 = vperm.xlu0 %112, %v24
    %v114 = vpop.permute.xlu0 %113
    %115 = vset.pattern.permute.xlu0 0
    %116 = vperm.xlu0 %115, %v25
    %v117 = vpop.permute.xlu0 %116
    %118 = vset.pattern.permute.xlu0 0
    %119 = vperm.xlu0 %118, %v26
    %v120 = vpop.permute.xlu0 %119
    %121 = vset.pattern.permute.xlu0 0
    %122 = vperm.xlu0 %121, %v27
    %v123 = vpop.permute.xlu0 %122
    %124 = vset.pattern.permute.xlu0 0
    %125 = vperm.xlu0 %124, %v28
    %v126 = vpop.permute.xlu0 %125
    %127 = vset.pattern.permute.xlu0 0
    %128 = vperm.xlu0 %127, %v29
    %v129 = vpop.permute.xlu0 %128
    %130 = vset.pattern.permute.xlu0 0
    %131 = vperm.xlu0 %130, %v30
    %v132 = vpop.permute.xlu0 %131
    %133 = vset.pattern.permute.xlu0 0
    %134 = vperm.xlu0 %133, %v31
    %v135 = vpop.permute.xlu0 %134
    %136 = vset.pattern.permute.xlu0 0
    %137 = vperm.xlu0 %136, %v32
    %v138 = vpop.permute.xlu0 %137
    %139 = vset.pattern.permute.xlu0 0
    %140 = vperm.xlu0 %139, %v33
    %v141 = vpop.permute.xlu0 %140
    %142 = vset.pattern.permute.xlu0 0
    %143 = vperm.xlu0 %142, %v34
    %v144 = vpop.permute.xlu0 %143
    %145 = vset.pattern.permute.xlu0 0
    %146 = vperm.xlu0 %145, %v35
    %v147 = vpop.permute.xlu0 %146
    %148 = vset.pattern.permute.xlu0 0
    %149 = vperm.xlu0 %148, %v36
    %v150 = vpop.permute.xlu0 %149
    %151 = vset.pattern.permute.xlu0 0
    %152 = vperm.xlu0 %151, %v37
    %v153 = vpop.permute.xlu0 %152
    %154 = vset.pattern.permute.xlu0 0
    %155 = vperm.xlu0 %154, %v38
    %v156 = vpop.permute.xlu0 %155
    %157 = vset.pattern.permute.xlu0 0
    %158 = vperm.xlu0 %157, %v39
    %v159 = vpop.permute.xlu0 %158
    %160 = vset.pattern.permute.xlu0 0
    %161 = vperm.xlu0 %160, %v40
    %v162 = vpop.permute.xlu0 %161
    %163 = vset.pattern.permute.xlu0 0
    %164 = vperm.xlu0 %163, %v41
    %v165 = vpop.permute.xlu0 %164
    %166 = vset.pattern.permute.xlu0 0
    %167 = vperm.xlu0 %166, %v42
    %v168 = vpop.permute.xlu0 %167
    %169 = vset.pattern.permute.xlu0 0
    %170 = vperm.xlu0 %169, %v43
    %v171 = vpop.permute.xlu0 %170
    %172 = vset.pattern.permute.xlu0 0
    %173 = vperm.xlu0 %172, %v44
    %v174 = vpop.permute.xlu0 %173
    %175 = vset.pattern.permute.xlu0 0
    %176 = vperm.xlu0 %175, %v45
    %v177 = vpop.permute.xlu0 %176
    %178 = vset.pattern.permute.xlu0 0
    %179 = vperm.xlu0 %178, %v46
    %v180 = vpop.permute.xlu0 %179
    %181 = vset.pattern.permute.xlu0 0
    %182 = vperm.xlu0 %181, %v47
    %v183 = vpop.permute.xlu0 %182
    %184 = vset.pattern.permute.xlu0 0
    %185 = vperm.xlu0 %184, %v48
    %v186 = vpop.permute.xlu0 %185
    %187 = vset.pattern.permute.xlu0 0
    %188 = vperm.xlu0 %187, %v49
    %v189 = vpop.permute.xlu0 %188
    %190 = vset.pattern.permute.xlu0 0
    %191 = vperm.xlu0 %190, %v50
    %v192 = vpop.permute.xlu0 %191
    %193 = vset.pattern.permute.xlu0 0
    %194 = vperm.xlu0 %193, %v51
    %v195 = vpop.permute.xlu0 %194
    %196 = vset.pattern.permute.xlu0 0
    %197 = vperm.xlu0 %196, %v52
    %v198 = vpop.permute.xlu0 %197
    %199 = vset.pattern.permute.xlu0 0
    %200 = vperm.xlu0 %199, %v53
    %v201 = vpop.permute.xlu0 %200
    %202 = vset.pattern.permute.xlu0 0
    %203 = vperm.xlu0 %202, %v54
    %v204 = vpop.permute.xlu0 %203
    %205 = vset.pattern.permute.xlu0 0
    %206 = vperm.xlu0 %205, %v55
    %v207 = vpop.permute.xlu0 %206
    %208 = vset.pattern.permute.xlu0 0
    %209 = vperm.xlu0 %208, %v56
    %v210 = vpop.permute.xlu0 %209
    %211 = vset.pattern.permute.xlu0 0
    %212 = vperm.xlu0 %211, %v57
    %v213 = vpop.permute.xlu0 %212
    %214 = vset.pattern.permute.xlu0 0
    %215 = vperm.xlu0 %214, %v58
    %v216 = vpop.permute.xlu0 %215
    %217 = vset.pattern.permute.xlu0 0
    %218 = vperm.xlu0 %217, %v59
    %v219 = vpop.permute.xlu0 %218
    %220 = vset.pattern.permute.xlu0 0
    %221 = vperm.xlu0 %220, %v60
    %v222 = vpop.permute.xlu0 %221
    %223 = vset.pattern.permute.xlu0 0
    %224 = vperm.xlu0 %223, %v61
    %v225 = vpop.permute.xlu0 %224
    %226 = vset.pattern.permute.xlu0 0
    %227 = vperm.xlu0 %226, %v62
    %v228 = vpop.permute.xlu0 %227
    %229 = vset.pattern.permute.xlu0 0
    %230 = vperm.xlu0 %229, %v63
    %v231 = vpop.permute.xlu0 %230
    %232 = vset.pattern.permute.xlu0 0
    %233 = vperm.xlu0 %232, %v64
    %v234 = vpop.permute.xlu0 %233
    %235 = vset.pattern.permute.xlu0 0
    %236 = vperm.xlu0 %235, %v65
    %v237 = vpop.permute.xlu0 %236
    %238 = vset.pattern.permute.xlu0 0
    %239 = vperm.xlu0 %238, %v66
    %v240 = vpop.permute.xlu0 %239
    %241 = vset.pattern.permute.xlu0 0
    %242 = vperm.xlu0 %241, %v67
    %v243 = vpop.permute.xlu0 %242
    %244 = vset.pattern.permute.xlu0 0
    %245 = vperm.xlu0 %244, %v68
    %v246 = vpop.permute.xlu0 %245
    %247 = vset.pattern.permute.xlu0 0
    %248 = vperm.xlu0 %247, %v69
    %v249 = vpop.permute.xlu0 %248
    %250 = vset.pattern.permute.xlu0 0
    %251 = vperm.xlu0 %250, %v70
    %v252 = vpop.permute.xlu0 %251
    %253 = vset.pattern.permute.xlu0 0
    %254 = vperm.xlu0 %253, %v71
    %v255 = vpop.permute.xlu0 %254
    %256 = vset.pattern.permute.xlu0 0
    %257 = vperm.xlu0 %256, %v72
    %v258 = vpop.permute.xlu0 %257
    %259 = vset.pattern.permute.xlu0 0
    %260 = vperm.xlu0 %259, %v73
    %v261 = vpop.permute.xlu0 %260
    %262 = vset.pattern.permute.xlu0 0
    %263 = vperm.xlu0 %262, %v74
    %v264 = vpop.permute.xlu0 %263
    %265 = vset.pattern.permute.xlu0 0
    %266 = vperm.xlu0 %265, %v75
    %v267 = vpop.permute.xlu0 %266
    %268 = vset.pattern.permute.xlu0 0
    %269 = vperm.xlu0 %268, %v76
    %v270 = vpop.permute.xlu0 %269
    %vm271 = vcmp.eq.s32.totalorder %v78, %v81
    %vm272 = vcmp.eq.s32.totalorder %v78, %v84
    %vm273 = vcmp.eq.s32.totalorder %v78, %v87
    %vm274 = vcmp.eq.s32.totalorder %v78, %v90
    %vm275 = vcmp.eq.s32.totalorder %v78, %v93
    %vm276 = vcmp.eq.s32.totalorder %v78, %v96
    %vm277 = vcmp.eq.s32.totalorder %v78, %v99
    %vm278 = vcmp.eq.s32.totalorder %v78, %v102
    %vm279 = vcmp.eq.s32.totalorder %v78, %v105
    %vm280 = vcmp.eq.s32.totalorder %v78, %v108
    %vm281 = vcmp.eq.s32.totalorder %v78, %v111
    %vm282 = vcmp.eq.s32.totalorder %v78, %v114
    %vm283 = vcmp.eq.s32.totalorder %v78, %v117
    %vm284 = vcmp.eq.s32.totalorder %v78, %v120
    %vm285 = vcmp.eq.s32.totalorder %v78, %v123
    %vm286 = vcmp.eq.s32.totalorder %v78, %v126
    %vm287 = vcmp.eq.s32.totalorder %v78, %v129
    %vm288 = vcmp.eq.s32.totalorder %v78, %v132
    %vm289 = vcmp.eq.s32.totalorder %v78, %v135
    %vm290 = vcmp.eq.s32.totalorder %v78, %v138
    %vm291 = vcmp.eq.s32.totalorder %v78, %v141
    %vm292 = vcmp.eq.s32.totalorder %v78, %v144
    %vm293 = vcmp.eq.s32.totalorder %v78, %v147
    %vm294 = vcmp.eq.s32.totalorder %v78, %v150
    %vm295 = vcmp.eq.s32.totalorder %v78, %v153
    %vm296 = vcmp.eq.s32.totalorder %v78, %v156
    %vm297 = vcmp.eq.s32.totalorder %v78, %v159
    %vm298 = vcmp.eq.s32.totalorder %v78, %v162
    %vm299 = vcmp.eq.s32.totalorder %v78, %v165
    %vm300 = vcmp.eq.s32.totalorder %v78, %v168
    %vm301 = vcmp.eq.s32.totalorder %v78, %v171
    %vm302 = vcmp.eq.s32.totalorder %v78, %v174
    %vm303 = vcmp.eq.s32.totalorder %v78, %v177
    %vm304 = vcmp.eq.s32.totalorder %v78, %v180
    %vm305 = vcmp.eq.s32.totalorder %v78, %v183
    %vm306 = vcmp.eq.s32.totalorder %v78, %v186
    %vm307 = vcmp.eq.s32.totalorder %v78, %v189
    %vm308 = vcmp.eq.s32.totalorder %v78, %v192
    %vm309 = vcmp.eq.s32.totalorder %v78, %v195
    %vm310 = vcmp.eq.s32.totalorder %v78, %v198
    %vm311 = vcmp.eq.s32.totalorder %v78, %v201
    %vm312 = vcmp.eq.s32.totalorder %v78, %v204
    %vm313 = vcmp.eq.s32.totalorder %v78, %v207
    %vm314 = vcmp.eq.s32.totalorder %v78, %v210
    %vm315 = vcmp.eq.s32.totalorder %v78, %v213
    %vm316 = vcmp.eq.s32.totalorder %v78, %v216
    %vm317 = vcmp.eq.s32.totalorder %v78, %v219
    %vm318 = vcmp.eq.s32.totalorder %v78, %v222
    %vm319 = vcmp.eq.s32.totalorder %v78, %v225
    %vm320 = vcmp.eq.s32.totalorder %v78, %v228
    %vm321 = vcmp.eq.s32.totalorder %v78, %v231
    %vm322 = vcmp.eq.s32.totalorder %v78, %v234
    %vm323 = vcmp.eq.s32.totalorder %v78, %v237
    %vm324 = vcmp.eq.s32.totalorder %v78, %v240
    %vm325 = vcmp.eq.s32.totalorder %v78, %v243
    %vm326 = vcmp.eq.s32.totalorder %v78, %v246
    %vm327 = vcmp.eq.s32.totalorder %v78, %v249
    %vm328 = vcmp.eq.s32.totalorder %v78, %v252
    %vm329 = vcmp.eq.s32.totalorder %v78, %v255
    %vm330 = vcmp.eq.s32.totalorder %v78, %v258
    %vm331 = vcmp.eq.s32.totalorder %v78, %v261
    %vm332 = vcmp.eq.s32.totalorder %v78, %v264
    %vm333 = vcmp.eq.s32.totalorder %v78, %v267
    %vm334 = vcmp.eq.s32.totalorder %v78, %v270
    %v335 = vsel %vm271, 1, 0
    %v336 = vsel %vm272, 1, 0
    %v337 = vsel %vm273, 1, 0
    %v338 = vsel %vm274, 1, 0
    %v339 = vsel %vm275, 1, 0
    %v340 = vsel %vm276, 1, 0
    %v341 = vsel %vm277, 1, 0
    %v342 = vsel %vm278, 1, 0
    %v343 = vsel %vm279, 1, 0
    %v344 = vsel %vm280, 1, 0
    %v345 = vsel %vm281, 1, 0
    %v346 = vsel %vm282, 1, 0
    %v347 = vsel %vm283, 1, 0
    %v348 = vsel %vm284, 1, 0
    %v349 = vsel %vm285, 1, 0
    %v350 = vsel %vm286, 1, 0
    %v351 = vsel %vm287, 1, 0
    %v352 = vsel %vm288, 1, 0
    %v353 = vsel %vm289, 1, 0
    %v354 = vsel %vm290, 1, 0
    %v355 = vsel %vm291, 1, 0
    %v356 = vsel %vm292, 1, 0
    %v357 = vsel %vm293, 1, 0
    %v358 = vsel %vm294, 1, 0
    %v359 = vsel %vm295, 1, 0
    %v360 = vsel %vm296, 1, 0
    %v361 = vsel %vm297, 1, 0
    %v362 = vsel %vm298, 1, 0
    %v363 = vsel %vm299, 1, 0
    %v364 = vsel %vm300, 1, 0
    %v365 = vsel %vm301, 1, 0
    %v366 = vsel %vm302, 1, 0
    %v367 = vsel %vm303, 1, 0
    %v368 = vsel %vm304, 1, 0
    %v369 = vsel %vm305, 1, 0
    %v370 = vsel %vm306, 1, 0
    %v371 = vsel %vm307, 1, 0
    %v372 = vsel %vm308, 1, 0
    %v373 = vsel %vm309, 1, 0
    %v374 = vsel %vm310, 1, 0
    %v375 = vsel %vm311, 1, 0
    %v376 = vsel %vm312, 1, 0
    %v377 = vsel %vm313, 1, 0
    %v378 = vsel %vm314, 1, 0
    %v379 = vsel %vm315, 1, 0
    %v380 = vsel %vm316, 1, 0
    %v381 = vsel %vm317, 1, 0
    %v382 = vsel %vm318, 1, 0
    %v383 = vsel %vm319, 1, 0
    %v384 = vsel %vm320, 1, 0
    %v385 = vsel %vm321, 1, 0
    %v386 = vsel %vm322, 1, 0
    %v387 = vsel %vm323, 1, 0
    %v388 = vsel %vm324, 1, 0
    %v389 = vsel %vm325, 1, 0
    %v390 = vsel %vm326, 1, 0
    %v391 = vsel %vm327, 1, 0
    %v392 = vsel %vm328, 1, 0
    %v393 = vsel %vm329, 1, 0
    %v394 = vsel %vm330, 1, 0
    %v395 = vsel %vm331, 1, 0
    %v396 = vsel %vm332, 1, 0
    %v397 = vsel %vm333, 1, 0
    %v398 = vsel %vm334, 1, 0
    %v399 = vcvt.s32.f32 %v335
    %v400 = vcvt.s32.f32 %v336
    %v401 = vcvt.s32.f32 %v337
    %v402 = vcvt.s32.f32 %v338
    %v403 = vcvt.s32.f32 %v339
    %v404 = vcvt.s32.f32 %v340
    %v405 = vcvt.s32.f32 %v341
    %v406 = vcvt.s32.f32 %v342
    %v407 = vcvt.s32.f32 %v343
    %v408 = vcvt.s32.f32 %v344
    %v409 = vcvt.s32.f32 %v345
    %v410 = vcvt.s32.f32 %v346
    %v411 = vcvt.s32.f32 %v347
    %v412 = vcvt.s32.f32 %v348
    %v413 = vcvt.s32.f32 %v349
    %v414 = vcvt.s32.f32 %v350
    %v415 = vcvt.s32.f32 %v351
    %v416 = vcvt.s32.f32 %v352
    %v417 = vcvt.s32.f32 %v353
    %v418 = vcvt.s32.f32 %v354
    %v419 = vcvt.s32.f32 %v355
    %v420 = vcvt.s32.f32 %v356
    %v421 = vcvt.s32.f32 %v357
    %v422 = vcvt.s32.f32 %v358
    %v423 = vcvt.s32.f32 %v359
    %v424 = vcvt.s32.f32 %v360
    %v425 = vcvt.s32.f32 %v361
    %v426 = vcvt.s32.f32 %v362
    %v427 = vcvt.s32.f32 %v363
    %v428 = vcvt.s32.f32 %v364
    %v429 = vcvt.s32.f32 %v365
    %v430 = vcvt.s32.f32 %v366
    %v431 = vcvt.s32.f32 %v367
    %v432 = vcvt.s32.f32 %v368
    %v433 = vcvt.s32.f32 %v369
    %v434 = vcvt.s32.f32 %v370
    %v435 = vcvt.s32.f32 %v371
    %v436 = vcvt.s32.f32 %v372
    %v437 = vcvt.s32.f32 %v373
    %v438 = vcvt.s32.f32 %v374
    %v439 = vcvt.s32.f32 %v375
    %v440 = vcvt.s32.f32 %v376
    %v441 = vcvt.s32.f32 %v377
    %v442 = vcvt.s32.f32 %v378
    %v443 = vcvt.s32.f32 %v379
    %v444 = vcvt.s32.f32 %v380
    %v445 = vcvt.s32.f32 %v381
    %v446 = vcvt.s32.f32 %v382
    %v447 = vcvt.s32.f32 %v383
    %v448 = vcvt.s32.f32 %v384
    %v449 = vcvt.s32.f32 %v385
    %v450 = vcvt.s32.f32 %v386
    %v451 = vcvt.s32.f32 %v387
    %v452 = vcvt.s32.f32 %v388
    %v453 = vcvt.s32.f32 %v389
    %v454 = vcvt.s32.f32 %v390
    %v455 = vcvt.s32.f32 %v391
    %v456 = vcvt.s32.f32 %v392
    %v457 = vcvt.s32.f32 %v393
    %v458 = vcvt.s32.f32 %v394
    %v459 = vcvt.s32.f32 %v395
    %v460 = vcvt.s32.f32 %v396
    %v461 = vcvt.s32.f32 %v397
    %v462 = vcvt.s32.f32 %v398
    %v463 = vpack.c.bf16 %v400, %v399
    %v464 = vpack.c.bf16 %v402, %v401
    %v465 = vpack.c.bf16 %v404, %v403
    %v466 = vpack.c.bf16 %v406, %v405
    %v467 = vpack.c.bf16 %v408, %v407
    %v468 = vpack.c.bf16 %v410, %v409
    %v469 = vpack.c.bf16 %v412, %v411
    %v470 = vpack.c.bf16 %v414, %v413
    %v471 = vpack.c.bf16 %v416, %v415
    %v472 = vpack.c.bf16 %v418, %v417
    %v473 = vpack.c.bf16 %v420, %v419
    %v474 = vpack.c.bf16 %v422, %v421
    %v475 = vpack.c.bf16 %v424, %v423
    %v476 = vpack.c.bf16 %v426, %v425
    %v477 = vpack.c.bf16 %v428, %v427
    %v478 = vpack.c.bf16 %v430, %v429
    %v479 = vpack.c.bf16 %v432, %v431
    %v480 = vpack.c.bf16 %v434, %v433
    %v481 = vpack.c.bf16 %v436, %v435
    %v482 = vpack.c.bf16 %v438, %v437
    %v483 = vpack.c.bf16 %v440, %v439
    %v484 = vpack.c.bf16 %v442, %v441
    %v485 = vpack.c.bf16 %v444, %v443
    %v486 = vpack.c.bf16 %v446, %v445
    %v487 = vpack.c.bf16 %v448, %v447
    %v488 = vpack.c.bf16 %v450, %v449
    %v489 = vpack.c.bf16 %v452, %v451
    %v490 = vpack.c.bf16 %v454, %v453
    %v491 = vpack.c.bf16 %v456, %v455
    %v492 = vpack.c.bf16 %v458, %v457
    %v493 = vpack.c.bf16 %v460, %v459
    %v494 = vpack.c.bf16 %v462, %v461
    %v495 = vld [vmem:[%s1] sm:$0xf]
    %v496 = vld [vmem:[%s1 + $0x4] sm:$0xf]
    %v497 = vld [vmem:[%s1 + $0x8] sm:$0xf]
    %v498 = vld [vmem:[%s1 + $0xc] sm:$0xf]
    %v499 = vld [vmem:[%s1 + $0x10] sm:$0xf]
    %v500 = vld [vmem:[%s1 + $0x14] sm:$0xf]
    %v501 = vld [vmem:[%s1 + $0x18] sm:$0xf]
    %v502 = vld [vmem:[%s1 + $0x1c] sm:$0xf]
    %v503 = vld [vmem:[%s1 + $0x20] sm:$0xf]
    %v504 = vld [vmem:[%s1 + $0x24] sm:$0xf]
    %v505 = vld [vmem:[%s1 + $0x28] sm:$0xf]
    %v506 = vld [vmem:[%s1 + $0x2c] sm:$0xf]
    %v519 = vunpack.c.l.b16 %v495
    %v520 = vunpack.c.l.b16 %v496
    %v521 = vunpack.c.l.b16 %v497
    %v522 = vunpack.c.l.b16 %v498
    %v523 = vunpack.c.l.b16 %v499
    %v524 = vunpack.c.l.b16 %v500
    %v525 = vunpack.c.l.b16 %v501
    %v526 = vunpack.c.l.b16 %v502
    %v527 = vunpack.c.l.b16 %v503
    %v528 = vunpack.c.l.b16 %v504
    %v529 = vunpack.c.l.b16 %v505
    %v530 = vunpack.c.l.b16 %v506
    %v531 = vpack.c.b16 %v520, %v519
    %v532 = vpack.c.b16 %v522, %v521
    %v533 = vpack.c.b16 %v524, %v523
    %v534 = vpack.c.b16 %v526, %v525
    %v535 = vpack.c.b16 %v528, %v527
    %v536 = vpack.c.b16 %v530, %v529
    %vm543 = vcmask 785408
    %v545 = vsel %vm543, %v463, 0
    %v548 = vsel %vm543, %v464, 0
    %v551 = vsel %vm543, %v465, 0
    %v554 = vsel %vm543, %v466, 0
    %v557 = vsel %vm543, %v467, 0
    %v560 = vsel %vm543, %v468, 0
    %v563 = vsel %vm543, %v469, 0
    %v566 = vsel %vm543, %v470, 0
    %v569 = vsel %vm543, %v471, 0
    %v572 = vsel %vm543, %v472, 0
    %v575 = vsel %vm543, %v473, 0
    %v578 = vsel %vm543, %v474, 0
    %v581 = vsel %vm543, %v475, 0
    %v584 = vsel %vm543, %v476, 0
    %v587 = vsel %vm543, %v477, 0
    %v590 = vsel %vm543, %v478, 0
    %v593 = vsel %vm543, %v479, 0
    %v596 = vsel %vm543, %v480, 0
    %v599 = vsel %vm543, %v481, 0
    %v602 = vsel %vm543, %v482, 0
    %v605 = vsel %vm543, %v483, 0
    %v608 = vsel %vm543, %v484, 0
    %v611 = vsel %vm543, %v485, 0
    %v614 = vsel %vm543, %v486, 0
    %v617 = vsel %vm543, %v487, 0
    %v620 = vsel %vm543, %v488, 0
    %v623 = vsel %vm543, %v489, 0
    %v626 = vsel %vm543, %v490, 0
    %v629 = vsel %vm543, %v491, 0
    %v632 = vsel %vm543, %v492, 0
    %v635 = vsel %vm543, %v493, 0
    %v638 = vsel %vm543, %v494, 0
    %640 = vmatpush.bf16.msra.mxu0 0
    %641 = vmatpush.bf16.msra.mxu0 0
    %642 = vmatpush.bf16.msra.mxu0 %v536
    %643 = vmatpush.bf16.msra.mxu0 %v535
    %644 = vmatpush.bf16.msra.mxu0 %v534
    %645 = vmatpush.bf16.msra.mxu0 %v533
    %646 = vmatpush.bf16.msra.mxu0 %v532
    %647 = vmatpush.bf16.msra.mxu0 %v531
    %648 = vmatmul.bf16.gmra.mxu0 %v545
    %v649 = vpop.f32.mrf.mxu0
    %v650 = vadd.f32 0.0, %v649
    %v651 = vpop.f32.mrf.mxu0
    %v652 = vadd.f32 0.0, %v651
    %653 = vmatmul.bf16.gmra.mxu0 %v548
    %v654 = vpop.f32.mrf.mxu0
    %v655 = vadd.f32 0.0, %v654
    %v656 = vpop.f32.mrf.mxu0
    %v657 = vadd.f32 0.0, %v656
    %658 = vmatmul.bf16.gmra.mxu0 %v551
    %v659 = vpop.f32.mrf.mxu0
    %v660 = vadd.f32 0.0, %v659
    %v661 = vpop.f32.mrf.mxu0
    %v662 = vadd.f32 0.0, %v661
    %663 = vmatmul.bf16.gmra.mxu0 %v554
    %v664 = vpop.f32.mrf.mxu0
    %v665 = vadd.f32 0.0, %v664
    %v666 = vpop.f32.mrf.mxu0
    %v667 = vadd.f32 0.0, %v666
    %668 = vmatmul.bf16.gmra.mxu0 %v557
    %v669 = vpop.f32.mrf.mxu0
    %v670 = vadd.f32 0.0, %v669
    %v671 = vpop.f32.mrf.mxu0
    %v672 = vadd.f32 0.0, %v671
    %673 = vmatmul.bf16.gmra.mxu0 %v560
    %v674 = vpop.f32.mrf.mxu0
    %v675 = vadd.f32 0.0, %v674
    %v676 = vpop.f32.mrf.mxu0
    %v677 = vadd.f32 0.0, %v676
    %678 = vmatmul.bf16.gmra.mxu0 %v563
    %v679 = vpop.f32.mrf.mxu0
    %v680 = vadd.f32 0.0, %v679
    %v681 = vpop.f32.mrf.mxu0
    %v682 = vadd.f32 0.0, %v681
    %683 = vmatmul.bf16.gmra.mxu0 %v566
    %v684 = vpop.f32.mrf.mxu0
    %v685 = vadd.f32 0.0, %v684
    %v686 = vpop.f32.mrf.mxu0
    %v687 = vadd.f32 0.0, %v686
    %688 = vmatmul.bf16.gmra.mxu0 %v569
    %v689 = vpop.f32.mrf.mxu0
    %v690 = vadd.f32 0.0, %v689
    %v691 = vpop.f32.mrf.mxu0
    %v692 = vadd.f32 0.0, %v691
    %693 = vmatmul.bf16.gmra.mxu0 %v572
    %v694 = vpop.f32.mrf.mxu0
    %v695 = vadd.f32 0.0, %v694
    %v696 = vpop.f32.mrf.mxu0
    %v697 = vadd.f32 0.0, %v696
    %698 = vmatmul.bf16.gmra.mxu0 %v575
    %v699 = vpop.f32.mrf.mxu0
    %v700 = vadd.f32 0.0, %v699
    %v701 = vpop.f32.mrf.mxu0
    %v702 = vadd.f32 0.0, %v701
    %703 = vmatmul.bf16.gmra.mxu0 %v578
    %v704 = vpop.f32.mrf.mxu0
    %v705 = vadd.f32 0.0, %v704
    %v706 = vpop.f32.mrf.mxu0
    %v707 = vadd.f32 0.0, %v706
    %708 = vmatmul.bf16.gmra.mxu0 %v581
    %v709 = vpop.f32.mrf.mxu0
    %v710 = vadd.f32 0.0, %v709
    %v711 = vpop.f32.mrf.mxu0
    %v712 = vadd.f32 0.0, %v711
    %713 = vmatmul.bf16.gmra.mxu0 %v584
    %v714 = vpop.f32.mrf.mxu0
    %v715 = vadd.f32 0.0, %v714
    %v716 = vpop.f32.mrf.mxu0
    %v717 = vadd.f32 0.0, %v716
    %718 = vmatmul.bf16.gmra.mxu0 %v587
    %v719 = vpop.f32.mrf.mxu0
    %v720 = vadd.f32 0.0, %v719
    %v721 = vpop.f32.mrf.mxu0
    %v722 = vadd.f32 0.0, %v721
    %723 = vmatmul.bf16.gmra.mxu0 %v590
    %v724 = vpop.f32.mrf.mxu0
    %v725 = vadd.f32 0.0, %v724
    %v726 = vpop.f32.mrf.mxu0
    %v727 = vadd.f32 0.0, %v726
    %728 = vmatmul.bf16.gmra.mxu0 %v593
    %v729 = vpop.f32.mrf.mxu0
    %v730 = vadd.f32 0.0, %v729
    %v731 = vpop.f32.mrf.mxu0
    %v732 = vadd.f32 0.0, %v731
    %733 = vmatmul.bf16.gmra.mxu0 %v596
    %v734 = vpop.f32.mrf.mxu0
    %v735 = vadd.f32 0.0, %v734
    %v736 = vpop.f32.mrf.mxu0
    %v737 = vadd.f32 0.0, %v736
    %738 = vmatmul.bf16.gmra.mxu0 %v599
    %v739 = vpop.f32.mrf.mxu0
    %v740 = vadd.f32 0.0, %v739
    %v741 = vpop.f32.mrf.mxu0
    %v742 = vadd.f32 0.0, %v741
    %743 = vmatmul.bf16.gmra.mxu0 %v602
    %v744 = vpop.f32.mrf.mxu0
    %v745 = vadd.f32 0.0, %v744
    %v746 = vpop.f32.mrf.mxu0
    %v747 = vadd.f32 0.0, %v746
    %748 = vmatmul.bf16.gmra.mxu0 %v605
    %v749 = vpop.f32.mrf.mxu0
    %v750 = vadd.f32 0.0, %v749
    %v751 = vpop.f32.mrf.mxu0
    %v752 = vadd.f32 0.0, %v751
    %753 = vmatmul.bf16.gmra.mxu0 %v608
    %v754 = vpop.f32.mrf.mxu0
    %v755 = vadd.f32 0.0, %v754
    %v756 = vpop.f32.mrf.mxu0
    %v757 = vadd.f32 0.0, %v756
    %758 = vmatmul.bf16.gmra.mxu0 %v611
    %v759 = vpop.f32.mrf.mxu0
    %v760 = vadd.f32 0.0, %v759
    %v761 = vpop.f32.mrf.mxu0
    %v762 = vadd.f32 0.0, %v761
    %763 = vmatmul.bf16.gmra.mxu0 %v614
    %v764 = vpop.f32.mrf.mxu0
    %v765 = vadd.f32 0.0, %v764
    %v766 = vpop.f32.mrf.mxu0
    %v767 = vadd.f32 0.0, %v766
    %768 = vmatmul.bf16.gmra.mxu0 %v617
    %v769 = vpop.f32.mrf.mxu0
    %v770 = vadd.f32 0.0, %v769
    %v771 = vpop.f32.mrf.mxu0
    %v772 = vadd.f32 0.0, %v771
    %773 = vmatmul.bf16.gmra.mxu0 %v620
    %v774 = vpop.f32.mrf.mxu0
    %v775 = vadd.f32 0.0, %v774
    %v776 = vpop.f32.mrf.mxu0
    %v777 = vadd.f32 0.0, %v776
    %778 = vmatmul.bf16.gmra.mxu0 %v623
    %v779 = vpop.f32.mrf.mxu0
    %v780 = vadd.f32 0.0, %v779
    %v781 = vpop.f32.mrf.mxu0
    %v782 = vadd.f32 0.0, %v781
    %783 = vmatmul.bf16.gmra.mxu0 %v626
    %v784 = vpop.f32.mrf.mxu0
    %v785 = vadd.f32 0.0, %v784
    %v786 = vpop.f32.mrf.mxu0
    %v787 = vadd.f32 0.0, %v786
    %788 = vmatmul.bf16.gmra.mxu0 %v629
    %v789 = vpop.f32.mrf.mxu0
    %v790 = vadd.f32 0.0, %v789
    %v791 = vpop.f32.mrf.mxu0
    %v792 = vadd.f32 0.0, %v791
    %793 = vmatmul.bf16.gmra.mxu0 %v632
    %v794 = vpop.f32.mrf.mxu0
    %v795 = vadd.f32 0.0, %v794
    %v796 = vpop.f32.mrf.mxu0
    %v797 = vadd.f32 0.0, %v796
    %798 = vmatmul.bf16.gmra.mxu0 %v635
    %v799 = vpop.f32.mrf.mxu0
    %v800 = vadd.f32 0.0, %v799
    %v801 = vpop.f32.mrf.mxu0
    %v802 = vadd.f32 0.0, %v801
    %803 = vmatmul.bf16.gmra.mxu0 %v638
    %v804 = vpop.f32.mrf.mxu0
    %v805 = vadd.f32 0.0, %v804
    %v806 = vpop.f32.mrf.mxu0
    %v807 = vadd.f32 0.0, %v806
    %808 = vdwg.mxu0
    %v809 = vpack.c.bf16 %v650, %v650
    %v810 = vpack.c.bf16 %v652, %v652
    %v811 = vpack.c.bf16 %v655, %v655
    %v812 = vpack.c.bf16 %v657, %v657
    %v813 = vpack.c.bf16 %v660, %v660
    %v814 = vpack.c.bf16 %v662, %v662
    %v815 = vpack.c.bf16 %v665, %v665
    %v816 = vpack.c.bf16 %v667, %v667
    %v817 = vpack.c.bf16 %v670, %v670
    %v818 = vpack.c.bf16 %v672, %v672
    %v819 = vpack.c.bf16 %v675, %v675
    %v820 = vpack.c.bf16 %v677, %v677
    %v821 = vpack.c.bf16 %v680, %v680
    %v822 = vpack.c.bf16 %v682, %v682
    %v823 = vpack.c.bf16 %v685, %v685
    %v824 = vpack.c.bf16 %v687, %v687
    %v825 = vpack.c.bf16 %v690, %v690
    %v826 = vpack.c.bf16 %v692, %v692
    %v827 = vpack.c.bf16 %v695, %v695
    %v828 = vpack.c.bf16 %v697, %v697
    %v829 = vpack.c.bf16 %v700, %v700
    %v830 = vpack.c.bf16 %v702, %v702
    %v831 = vpack.c.bf16 %v705, %v705
    %v832 = vpack.c.bf16 %v707, %v707
    %v833 = vpack.c.bf16 %v710, %v710
    %v834 = vpack.c.bf16 %v712, %v712
    %v835 = vpack.c.bf16 %v715, %v715
    %v836 = vpack.c.bf16 %v717, %v717
    %v837 = vpack.c.bf16 %v720, %v720
    %v838 = vpack.c.bf16 %v722, %v722
    %v839 = vpack.c.bf16 %v725, %v725
    %v840 = vpack.c.bf16 %v727, %v727
    %v841 = vpack.c.bf16 %v730, %v730
    %v842 = vpack.c.bf16 %v732, %v732
    %v843 = vpack.c.bf16 %v735, %v735
    %v844 = vpack.c.bf16 %v737, %v737
    %v845 = vpack.c.bf16 %v740, %v740
    %v846 = vpack.c.bf16 %v742, %v742
    %v847 = vpack.c.bf16 %v745, %v745
    %v848 = vpack.c.bf16 %v747, %v747
    %v849 = vpack.c.bf16 %v750, %v750
    %v850 = vpack.c.bf16 %v752, %v752
    %v851 = vpack.c.bf16 %v755, %v755
    %v852 = vpack.c.bf16 %v757, %v757
    %v853 = vpack.c.bf16 %v760, %v760
    %v854 = vpack.c.bf16 %v762, %v762
    %v855 = vpack.c.bf16 %v765, %v765
    %v856 = vpack.c.bf16 %v767, %v767
    %v857 = vpack.c.bf16 %v770, %v770
    %v858 = vpack.c.bf16 %v772, %v772
    %v859 = vpack.c.bf16 %v775, %v775
    %v860 = vpack.c.bf16 %v777, %v777
    %v861 = vpack.c.bf16 %v780, %v780
    %v862 = vpack.c.bf16 %v782, %v782
    %v863 = vpack.c.bf16 %v785, %v785
    %v864 = vpack.c.bf16 %v787, %v787
    %v865 = vpack.c.bf16 %v790, %v790
    %v866 = vpack.c.bf16 %v792, %v792
    %v867 = vpack.c.bf16 %v795, %v795
    %v868 = vpack.c.bf16 %v797, %v797
    %v869 = vpack.c.bf16 %v800, %v800
    %v870 = vpack.c.bf16 %v802, %v802
    %v871 = vpack.c.bf16 %v805, %v805
    %v872 = vpack.c.bf16 %v807, %v807
    %873 = vst [vmem:[#allocation3] sm:$0xf] %v809
    %874 = vst [vmem:[#allocation3 + $0x4] sm:$0xf] %v810
    %875 = vst [vmem:[#allocation3 + $0x8] sm:$0xf] %v811
    %876 = vst [vmem:[#allocation3 + $0xc] sm:$0xf] %v812
    %877 = vst [vmem:[#allocation3 + $0x10] sm:$0xf] %v813
    %878 = vst [vmem:[#allocation3 + $0x14] sm:$0xf] %v814
    %879 = vst [vmem:[#allocation3 + $0x18] sm:$0xf] %v815
    %880 = vst [vmem:[#allocation3 + $0x1c] sm:$0xf] %v816
    %881 = vst [vmem:[#allocation3 + $0x20] sm:$0xf] %v817
    %882 = vst [vmem:[#allocation3 + $0x24] sm:$0xf] %v818
    %883 = vst [vmem:[#allocation3 + $0x28] sm:$0xf] %v819
    %884 = vst [vmem:[#allocation3 + $0x2c] sm:$0xf] %v820
    %885 = vst [vmem:[#allocation3 + $0x30] sm:$0xf] %v821
    %886 = vst [vmem:[#allocation3 + $0x34] sm:$0xf] %v822
    %887 = vst [vmem:[#allocation3 + $0x38] sm:$0xf] %v823
    %888 = vst [vmem:[#allocation3 + $0x3c] sm:$0xf] %v824
    %889 = vst [vmem:[#allocation3 + $0x40] sm:$0xf] %v825
    %890 = vst [vmem:[#allocation3 + $0x44] sm:$0xf] %v826
    %891 = vst [vmem:[#allocation3 + $0x48] sm:$0xf] %v827
    %892 = vst [vmem:[#allocation3 + $0x4c] sm:$0xf] %v828
    %893 = vst [vmem:[#allocation3 + $0x50] sm:$0xf] %v829
    %894 = vst [vmem:[#allocation3 + $0x54] sm:$0xf] %v830
    %895 = vst [vmem:[#allocation3 + $0x58] sm:$0xf] %v831
    %896 = vst [vmem:[#allocation3 + $0x5c] sm:$0xf] %v832
    %897 = vst [vmem:[#allocation3 + $0x60] sm:$0xf] %v833
    %898 = vst [vmem:[#allocation3 + $0x64] sm:$0xf] %v834
    %899 = vst [vmem:[#allocation3 + $0x68] sm:$0xf] %v835
    %900 = vst [vmem:[#allocation3 + $0x6c] sm:$0xf] %v836
    %901 = vst [vmem:[#allocation3 + $0x70] sm:$0xf] %v837
    %902 = vst [vmem:[#allocation3 + $0x74] sm:$0xf] %v838
    %903 = vst [vmem:[#allocation3 + $0x78] sm:$0xf] %v839
    %904 = vst [vmem:[#allocation3 + $0x7c] sm:$0xf] %v840
    %905 = vst [vmem:[#allocation3 + $0x80] sm:$0xf] %v841
    %906 = vst [vmem:[#allocation3 + $0x84] sm:$0xf] %v842
    %907 = vst [vmem:[#allocation3 + $0x88] sm:$0xf] %v843
    %908 = vst [vmem:[#allocation3 + $0x8c] sm:$0xf] %v844
    %909 = vst [vmem:[#allocation3 + $0x90] sm:$0xf] %v845
    %910 = vst [vmem:[#allocation3 + $0x94] sm:$0xf] %v846
    %911 = vst [vmem:[#allocation3 + $0x98] sm:$0xf] %v847
    %912 = vst [vmem:[#allocation3 + $0x9c] sm:$0xf] %v848
    %913 = vst [vmem:[#allocation3 + $0xa0] sm:$0xf] %v849
    %914 = vst [vmem:[#allocation3 + $0xa4] sm:$0xf] %v850
    %915 = vst [vmem:[#allocation3 + $0xa8] sm:$0xf] %v851
    %916 = vst [vmem:[#allocation3 + $0xac] sm:$0xf] %v852
    %917 = vst [vmem:[#allocation3 + $0xb0] sm:$0xf] %v853
    %918 = vst [vmem:[#allocation3 + $0xb4] sm:$0xf] %v854
    %919 = vst [vmem:[#allocation3 + $0xb8] sm:$0xf] %v855
    %920 = vst [vmem:[#allocation3 + $0xbc] sm:$0xf] %v856
    %921 = vst [vmem:[#allocation3 + $0xc0] sm:$0xf] %v857
    %922 = vst [vmem:[#allocation3 + $0xc4] sm:$0xf] %v858
    %923 = vst [vmem:[#allocation3 + $0xc8] sm:$0xf] %v859
    %924 = vst [vmem:[#allocation3 + $0xcc] sm:$0xf] %v860
    %925 = vst [vmem:[#allocation3 + $0xd0] sm:$0xf] %v861
    %926 = vst [vmem:[#allocation3 + $0xd4] sm:$0xf] %v862
    %927 = vst [vmem:[#allocation3 + $0xd8] sm:$0xf] %v863
    %928 = vst [vmem:[#allocation3 + $0xdc] sm:$0xf] %v864
    %929 = vst [vmem:[#allocation3 + $0xe0] sm:$0xf] %v865
    %930 = vst [vmem:[#allocation3 + $0xe4] sm:$0xf] %v866
    %931 = vst [vmem:[#allocation3 + $0xe8] sm:$0xf] %v867
    %932 = vst [vmem:[#allocation3 + $0xec] sm:$0xf] %v868
    %933 = vst [vmem:[#allocation3 + $0xf0] sm:$0xf] %v869
    %934 = vst [vmem:[#allocation3 + $0xf4] sm:$0xf] %v870
    %935 = vst [vmem:[#allocation3 + $0xf8] sm:$0xf] %v871
    %936 = vst [vmem:[#allocation3 + $0xfc] sm:$0xf] %v872
    // Predicated region
    $region10: #{tpu_custom_call.1} parent=1 // pred_check
      _
    $region11: #{tpu_custom_call.1} parent=1 // pred_check_branch
      %938 = sbr.rel (0) target = $region13
    $region12: #{tpu_custom_call.1} parent=1 // pred_region
      %940 = vsyncadd [#allocation4], 0
      %s941 = sshll.u32 [#allocation3], 4
      %s942 = int_to_ptr.vmem [resolvable:$true] %s941
      %s943 = sshll.u32 %s2, 4
      %s944 = int_to_ptr.hbm [resolvable:$true] %s943
      %949 = dma.vmem_to_hbm [thread:$0]  %s942, 4096, %s944, [#allocation4], 64, 64, 4
    $region13: #{tpu_custom_call.1} parent=1 // pred_fallthru
      _
    // Predicated region
    $region14: #{tpu_custom_call.1} parent=1 // pred_check
      _
    $region15: #{tpu_custom_call.1} parent=1 // pred_check_branch
      %951 = sbr.rel (0) target = $region17
    $region16: #{tpu_custom_call.1} parent=1 // pred_region
      %953 = dma.done [#allocation4], 4096
    $region17: #{tpu_custom_call.1} parent=1 // pred_fallthru
      _
    %954 = vsyncpa [#allocation4], 1

</llo_original>
